<compile_context>
chip_gen: v7x
topology: tpu7x:2x2x1
jax: 0.10.0
libtpu: 0.0.40
codegen_flags: <defaults>
</compile_context>

<pallas_src>
import functools

import jax
import jax.numpy as jnp
import numpy as np
from jax.experimental import pallas as pl
from jax.experimental.pallas import tpu as pltpu

LANE = 128
VMEM_PLAN_BYTES = 24 * 1024 * 1024    # target double-buffered working set
VMEM_LIMIT_BYTES = 48 * 1024 * 1024   # scoped limit handed to Mosaic (<= 64 MiB v7x)


def _round_up(x, m):
    return (x + m - 1) // m * m


def _num_tensorcores():
    """TensorCores per chip: 2 on megacore (v4/v5p) and v7x, else 1."""
    try:
        kind = jax.devices()[0].device_kind.lower()
    except Exception:
        return 1
    return 2 if any(t in kind for t in ("v4", "v5p", "v7")) else 1


# ----------------------------- Pallas kernels ------------------------------ #

def _gemm_bias_kernel(relu, x_ref, w_ref, bias_ref, o_ref):
    """o = maybe_relu(x @ w + bias); full-K block, no accumulator scratch."""
    y = jnp.dot(x_ref[...], w_ref[...], preferred_element_type=jnp.float32)
    y = y + bias_ref[...]
    if relu:
        y = jnp.maximum(y, 0.0)
    o_ref[...] = y.astype(o_ref.dtype)


def _gemm_res_kernel(has_ds, emit_pout, *refs):
    """pout = x @ w + bias + residual ; out = relu(pout).  Full-K block.

    residual is either a precomputed (tm, tn) bf16 tile (identity branch) or
    computed in-kernel as res_cols @ w_ds + b_ds (downsample branch: fused
    1x1 stride-2 conv + BN)."""
    if has_ds:
        x_ref, w_ref, bias_ref, res_ref, wds_ref, bds_ref = refs[:6]
        refs = refs[6:]
    else:
        x_ref, w_ref, bias_ref, res_ref = refs[:4]
        refs = refs[4:]
    if emit_pout:
        pout_ref, out_ref = refs
    else:
        (out_ref,) = refs

    p = jnp.dot(x_ref[...], w_ref[...], preferred_element_type=jnp.float32)
    p = p + bias_ref[...]
    if has_ds:
        p = p + (jnp.dot(res_ref[...], wds_ref[...],
                         preferred_element_type=jnp.float32) + bds_ref[...])
    else:
        p = p + res_ref[...].astype(jnp.float32)
    if emit_pout:
        pout_ref[...] = p.astype(pout_ref.dtype)
    out_ref[...] = jnp.maximum(p, 0.0).astype(out_ref.dtype)


# --- K-tiled fallback kernels (only used when full-K does not fit VMEM) ---- #

def _gemm_bias_acc_kernel(relu, x_ref, w_ref, bias_ref, o_ref, acc_ref):
    k_idx = pl.program_id(2)

    @pl.when(k_idx == 0)
    def _init():
        acc_ref[...] = jnp.zeros_like(acc_ref)

    acc_ref[...] += jnp.dot(x_ref[...], w_ref[...],
                            preferred_element_type=jnp.float32)

    @pl.when(k_idx == pl.num_programs(2) - 1)
    def _epilogue():
        y = acc_ref[...] + bias_ref[...]
        if relu:
            y = jnp.maximum(y, 0.0)
        o_ref[...] = y.astype(o_ref.dtype)


def _gemm_res_acc_kernel(has_ds, emit_pout, *refs):
    if has_ds:
        x_ref, w_ref, bias_ref, res_ref, wds_ref, bds_ref = refs[:6]
        refs = refs[6:]
    else:
        x_ref, w_ref, bias_ref, res_ref = refs[:4]
        refs = refs[4:]
    if emit_pout:
        pout_ref, out_ref, acc_ref = refs
    else:
        out_ref, acc_ref = refs

    k_idx = pl.program_id(2)

    @pl.when(k_idx == 0)
    def _init():
        acc_ref[...] = jnp.zeros_like(acc_ref)

    acc_ref[...] += jnp.dot(x_ref[...], w_ref[...],
                            preferred_element_type=jnp.float32)

    @pl.when(k_idx == pl.num_programs(2) - 1)
    def _epilogue():
        p = acc_ref[...] + bias_ref[...]
        if has_ds:
            r = jnp.dot(res_ref[...], wds_ref[...],
                        preferred_element_type=jnp.float32) + bds_ref[...]
        else:
            r = res_ref[...].astype(jnp.float32)
        p = p + r
        if emit_pout:
            pout_ref[...] = p.astype(pout_ref.dtype)
        out_ref[...] = jnp.maximum(p, 0.0).astype(out_ref.dtype)


# ------------------------------ tiling helpers ------------------------------ #

def _pick_tn(n_pad):
    """Full-N block while it fits (ResNet basic blocks: n_pad <= 512)."""
    if n_pad <= 1024:
        return n_pad
    for t in (512, 384, 256, 128):
        if n_pad % t == 0:
            return t
    return 128


def _working_set(tm, tn, k, res_row_bytes, n_out, out_bytes):
    """Conservative double-buffered VMEM estimate for one grid step (bytes)."""
    x = tm * k * 2                       # bf16 activations tile
    w = k * tn * 2                       # bf16 weight tile
    res = tm * res_row_bytes             # residual / ds columns tile
    out = tm * tn * out_bytes * n_out
    return 2 * (x + w + res + out)


def _pick_tm_tk(m_pad, k_pad, tn, nj, res_row_bytes, n_out, out_bytes):
    """Returns (tm, full_k, tk).  Prefers full-K blocks and big M tiles."""
    cands = [t for t in (1024, 512, 256, 128) if m_pad % t == 0] or [m_pad]
    fitting = [t for t in cands
               if _working_set(t, tn, k_pad, res_row_bytes, n_out,
                               out_bytes) <= VMEM_PLAN_BYTES]
    if fitting:
        tm = fitting[0]
        # Dual-TensorCore chips: take the 2-way split from the N axis if it
        # already has >= 2 steps; otherwise split M, but never below 128 rows.
        # Single-TC v5e/v6e keep the full-size M tile (splitting is overhead).
        if _num_tensorcores() >= 2 and nj < 2:
            split = [t for t in fitting if m_pad // t >= 2]
            if split:
                tm = split[0]
        return tm, True, k_pad
    tk = next((t for t in (512, 256, 128) if k_pad % t == 0), 128)
    return cands[-1], False, tk


# ------------------------------ pallas wrappers ----------------------------- #

def conv_bn_act(x_cols, w, bias, *, relu, out_dtype=jnp.bfloat16):
    """Fused conv-as-matmul (+ folded BN bias) (+ optional ReLU)."""
    m_pad, k_pad = x_cols.shape
    n_pad = w.shape[1]
    tn = _pick_tn(n_pad)
    nj = n_pad // tn
    out_bytes = jnp.dtype(out_dtype).itemsize
    tm, full_k, tk = _pick_tm_tk(m_pad, k_pad, tn, nj, 0, 1, out_bytes)
    out_shape = jax.ShapeDtypeStruct((m_pad, n_pad), out_dtype)

    if full_k:
        return pl.pallas_call(
            functools.partial(_gemm_bias_kernel, relu),
            out_shape=out_shape,
            grid=(m_pad // tm, nj),
            in_specs=[
                pl.BlockSpec((tm, k_pad), lambda i, j: (i, 0)),
                # Grid-invariant across the M axis -> weight DMA'd once per j.
                pl.BlockSpec((k_pad, tn), lambda i, j: (0, j)),
                pl.BlockSpec((1, tn), lambda i, j: (0, j)),
            ],
            out_specs=pl.BlockSpec((tm, tn), lambda i, j: (i, j)),
            compiler_params=pltpu.CompilerParams(
                dimension_semantics=("parallel", "parallel"),
                vmem_limit_bytes=VMEM_LIMIT_BYTES),
        )(x_cols, w, bias)

    # K-tiled fallback (very large layers only).
    return pl.pallas_call(
        functools.partial(_gemm_bias_acc_kernel, relu),
        out_shape=out_shape,
        grid=(m_pad // tm, nj, k_pad // tk),
        in_specs=[
            pl.BlockSpec((tm, tk), lambda i, j, k: (i, k)),
            pl.BlockSpec((tk, tn), lambda i, j, k: (k, j)),
            pl.BlockSpec((1, tn), lambda i, j, k: (0, j)),
        ],
        out_specs=pl.BlockSpec((tm, tn), lambda i, j, k: (i, j)),
        scratch_shapes=[pltpu.VMEM((tm, tn), jnp.float32)],
        compiler_params=pltpu.CompilerParams(
            dimension_semantics=("parallel", "parallel", "arbitrary"),
            vmem_limit_bytes=VMEM_LIMIT_BYTES),
    )(x_cols, w, bias)


def conv_bn_add_relu(x_cols, w, bias, res, wds=None, bds=None, *,
                     emit_pout, out_dtype=jnp.bfloat16):
    """Fused conv-matmul + BN bias + residual (+ in-kernel 1x1 ds conv) + ReLU."""
    m_pad, k_pad = x_cols.shape
    n_pad = w.shape[1]
    has_ds = wds is not None
    tn = _pick_tn(n_pad)
    nj = n_pad // tn
    out_bytes = jnp.dtype(out_dtype).itemsize
    n_out = 2 if emit_pout else 1
    res_row_bytes = (res.shape[1] if has_ds else tn) * res.dtype.itemsize
    tm, full_k, tk = _pick_tm_tk(m_pad, k_pad, tn, nj, res_row_bytes, n_out,
                                 out_bytes)

    if emit_pout:
        out_shape = (jax.ShapeDtypeStruct((m_pad, n_pad), out_dtype),
                     jax.ShapeDtypeStruct((m_pad, n_pad), out_dtype))
    else:
        out_shape = jax.ShapeDtypeStruct((m_pad, n_pad), out_dtype)

    if full_k:
        in_specs = [
            pl.BlockSpec((tm, k_pad), lambda i, j: (i, 0)),
            pl.BlockSpec((k_pad, tn), lambda i, j: (0, j)),
            pl.BlockSpec((1, tn), lambda i, j: (0, j)),
        ]
        inputs = [x_cols, w, bias]
        if has_ds:
            rk = res.shape[1]
            in_specs += [
                pl.BlockSpec((tm, rk), lambda i, j: (i, 0)),
                pl.BlockSpec((rk, tn), lambda i, j: (0, j)),
                pl.BlockSpec((1, tn), lambda i, j: (0, j)),
            ]
            inputs += [res, wds, bds]
        else:
            in_specs.append(pl.BlockSpec((tm, tn), lambda i, j: (i, j)))
            inputs.append(res)
        out_block = pl.BlockSpec((tm, tn), lambda i, j: (i, j))
        out_specs = (out_block, out_block) if emit_pout else out_block
        return pl.pallas_call(
            functools.partial(_gemm_res_kernel, has_ds, emit_pout),
            out_shape=out_shape,
            grid=(m_pad // tm, nj),
            in_specs=in_specs,
            out_specs=out_specs,
            compiler_params=pltpu.CompilerParams(
                dimension_semantics=("parallel", "parallel"),
                vmem_limit_bytes=VMEM_LIMIT_BYTES),
        )(*inputs)

    # K-tiled fallback (very large layers only).
    in_specs = [
        pl.BlockSpec((tm, tk), lambda i, j, k: (i, k)),
        pl.BlockSpec((tk, tn), lambda i, j, k: (k, j)),
        pl.BlockSpec((1, tn), lambda i, j, k: (0, j)),
    ]
    inputs = [x_cols, w, bias]
    if has_ds:
        rk = res.shape[1]
        in_specs += [
            pl.BlockSpec((tm, rk), lambda i, j, k: (i, 0)),
            pl.BlockSpec((rk, tn), lambda i, j, k: (0, j)),
            pl.BlockSpec((1, tn), lambda i, j, k: (0, j)),
        ]
        inputs += [res, wds, bds]
    else:
        in_specs.append(pl.BlockSpec((tm, tn), lambda i, j, k: (i, j)))
        inputs.append(res)
    out_block = pl.BlockSpec((tm, tn), lambda i, j, k: (i, j))
    out_specs = (out_block, out_block) if emit_pout else out_block
    return pl.pallas_call(
        functools.partial(_gemm_res_acc_kernel, has_ds, emit_pout),
        out_shape=out_shape,
        grid=(m_pad // tm, nj, k_pad // tk),
        in_specs=in_specs,
        out_specs=out_specs,
        scratch_shapes=[pltpu.VMEM((tm, tn), jnp.float32)],
        compiler_params=pltpu.CompilerParams(
            dimension_semantics=("parallel", "parallel", "arbitrary"),
            vmem_limit_bytes=VMEM_LIMIT_BYTES),
    )(*inputs)


# ------------------------------- JAX glue ---------------------------------- #

def im2col(x_nhwc, ksize, stride, pad, m_pad, k_pad):
    """Extract conv patches straight into the padded GEMM shape (m_pad, k_pad)."""
    n, h, w, c = x_nhwc.shape
    xp = jnp.pad(x_nhwc, ((0, 0), (pad, pad), (pad, pad), (0, 0)))
    ho = (h + 2 * pad - ksize) // stride + 1
    wo = (w + 2 * pad - ksize) // stride + 1
    cols = [xp[:, ky:ky + stride * ho:stride, kx:kx + stride * wo:stride, :]
            for ky in range(ksize) for kx in range(ksize)]
    patches = jnp.stack(cols, axis=3).reshape(n * ho * wo, ksize * ksize * c)
    m, k = patches.shape
    return jnp.pad(patches, ((0, m_pad - m), (0, k_pad - k)))


def fold_bn(gamma, beta, mean, var, eps=1e-5):
    scale = gamma / jnp.sqrt(var + eps)
    bias = beta - mean * scale
    return scale, bias


def pack_weight(w_oihw, scale, k_pad, cout_pad):
    """OIHW conv weight -> bf16 (k_pad, cout_pad) with BN scale folded in."""
    cout, cin, kh, kw = w_oihw.shape
    w = jnp.transpose(w_oihw, (2, 3, 1, 0)).reshape(kh * kw * cin, cout)
    w = w * scale[None, :]
    w = jnp.pad(w, ((0, k_pad - kh * kw * cin), (0, cout_pad - cout)))
    return w.astype(jnp.bfloat16)


def pack_bias(bias, cout_pad):
    return jnp.pad(bias, (0, cout_pad - bias.shape[0])).reshape(1, -1).astype(
        jnp.float32)


def init_params(key, cin, cout):
    ks = jax.random.split(key, 3)

    def bn_init(c, shift):
        return (1.0 + 0.10 * jnp.arange(c, dtype=jnp.float32) + shift,   # gamma
                0.05 * jnp.arange(c, dtype=jnp.float32) - shift,         # beta
                0.02 * jnp.arange(c, dtype=jnp.float32) + 0.1 * shift,   # running_mean
                1.0 + 0.03 * jnp.arange(c, dtype=jnp.float32))           # running_var

    p = {
        "w1": jax.random.normal(ks[0], (cout, cin, 3, 3), jnp.float32) * 0.2,
        "w2": jax.random.normal(ks[1], (cout, cout, 3, 3), jnp.float32) * 0.2,
        "bn1": bn_init(cout, 0.0),
        "bn2": bn_init(cout, 0.1),
    }
    if cin != cout:
        p["wds"] = jax.random.normal(ks[2], (cout, cin, 1, 1), jnp.float32) * 0.2
        p["bnds"] = bn_init(cout, 0.2)
    return p


def resblock_forward(x_nchw, params, *, return_before_act):
    cout, cin = params["w1"].shape[0], params["w1"].shape[1]
    downsample = cin != cout
    stride1 = 2 if downsample else 1

    x_bf = jnp.transpose(x_nchw, (0, 2, 3, 1)).astype(jnp.bfloat16)  # NHWC bf16
    n, h, w_sp, _ = x_bf.shape
    ho = (h + 2 - 3) // stride1 + 1
    wo = (w_sp + 2 - 3) // stride1 + 1
    m = n * ho * wo
    m_pad = _round_up(m, LANE)
    cout_pad = _round_up(cout, LANE)

    # conv1 + bn1 + relu (bf16 GEMM, BN scale folded into weights)
    sc1, b1 = fold_bn(*params["bn1"])
    k1_pad = _round_up(9 * cin, LANE)
    cols1 = im2col(x_bf, 3, stride1, 1, m_pad, k1_pad)
    h1 = conv_bn_act(cols1, pack_weight(params["w1"], sc1, k1_pad, cout_pad),
                     pack_bias(b1, cout_pad), relu=True)

    # conv2 + bn2 + residual + relu in one fused kernel
    h1_img = h1[:m, :cout].reshape(n, ho, wo, cout)
    k2_pad = _round_up(9 * cout, LANE)
    cols2 = im2col(h1_img, 3, 1, 1, m_pad, k2_pad)
    sc2, b2 = fold_bn(*params["bn2"])
    w2 = pack_weight(params["w2"], sc2, k2_pad, cout_pad)
    b2p = pack_bias(b2, cout_pad)

    if downsample:
        # 1x1 stride-2 conv + BN residual fused into the final kernel.
        rk_pad = _round_up(cin, LANE)
        res_cols = x_bf[:, ::2, ::2, :].reshape(m, cin)
        res_cols = jnp.pad(res_cols, ((0, m_pad - m), (0, rk_pad - cin)))
        scd, bd = fold_bn(*params["bnds"])
        wds = pack_weight(params["wds"], scd, rk_pad, cout_pad)
        bdp = pack_bias(bd, cout_pad)
        result = conv_bn_add_relu(cols2, w2, b2p, res_cols, wds, bdp,
                                  emit_pout=return_before_act)
    else:
        # Identity residual streamed in bf16 (matches the bf16 GEMM path).
        residual = jnp.pad(x_bf.reshape(m, cin),
                           ((0, m_pad - m), (0, cout_pad - cin)))
        result = conv_bn_add_relu(cols2, w2, b2p, residual,
                                  emit_pout=return_before_act)

    def to_nchw(flat):
        img = flat[:m, :cout].reshape(n, ho, wo, cout)
        # Upcast outside the kernels; the HBM writes stayed bf16.
        return jnp.transpose(img, (0, 3, 1, 2)).astype(jnp.float32)

    if return_before_act:
        pout_f, out_f = result
        return to_nchw(pout_f), to_nchw(out_f)
    return to_nchw(result)


# --------------------------- pure-JAX reference ----------------------------- #

def _conv_ref(x_nchw, w_oihw, stride, pad):
    return jax.lax.conv_general_dilated(
        x_nchw, w_oihw, window_strides=(stride, stride),
        padding=[(pad, pad), (pad, pad)],
        dimension_numbers=("NCHW", "OIHW", "NCHW"))


def _bn_ref(x_nchw, gamma, beta, mean, var, eps=1e-5):
    def e(v):
        return v[None, :, None, None]
    return (x_nchw - e(mean)) / jnp.sqrt(e(var) + eps) * e(gamma) + e(beta)


def resblock_ref(x_nchw, params):
    cout, cin = params["w1"].shape[0], params["w1"].shape[1]
    downsample = cin != cout
    stride1 = 2 if downsample else 1
    h = _conv_ref(x_nchw, params["w1"], stride1, 1)
    h = jnp.maximum(_bn_ref(h, *params["bn1"]), 0.0)
    h = _conv_ref(h, params["w2"], 1, 1)
    h = _bn_ref(h, *params["bn2"])
    if downsample:
        r = _bn_ref(_conv_ref(x_nchw, params["wds"], 2, 0), *params["bnds"])
    else:
        r = x_nchw
    pout = h + r
    return pout, jnp.maximum(pout, 0.0)


# ---------------------------------- main ------------------------------------ #

if __name__ == "__main__":
    key = jax.random.PRNGKey(0)
    x = jax.random.normal(key, (2, 4, 16, 16), jnp.float32)   # NCHW like PyTorch

    # Tolerance reflects bf16 matmul inputs / bf16 outputs vs f32 reference.
    RTOL = ATOL = 8e-2

    configs = [
        # (in_channels, out_channels, return_before_act)
        (4, 8, True),    # downsample branch (stride-2 conv + fused 1x1 ds conv)
        (4, 4, False),   # identity residual branch
    ]

    for cin, cout, rba in configs:
        params = init_params(jax.random.PRNGKey(100 * cin + cout), cin, cout)

        result = resblock_forward(x, params, return_before_act=rba)
        ref_pout, ref_out = resblock_ref(x, params)

        if rba:
            pout, out = result
            jax.block_until_ready((pout, out))
            np.testing.assert_allclose(np.asarray(pout), np.asarray(ref_pout),
                                       rtol=RTOL, atol=ATOL)
            np.testing.assert_allclose(np.asarray(out), np.asarray(ref_out),
                                       rtol=RTOL, atol=ATOL)
        else:
            out = result
            jax.block_until_ready(out)
            np.testing.assert_allclose(np.asarray(out), np.asarray(ref_out),
                                       rtol=RTOL, atol=ATOL)

    print("KERNEL_OK")
</pallas_src>

<mosaic_0001>
module attributes {stable_mosaic.version = 11 : i64} {
  func.func @_gemm_bias_kernel(%arg0: i32, %arg1: i32, %arg2: memref<128x128xbf16, #tpu.memory_space<vmem>>, %arg3: memref<128x128xbf16, #tpu.memory_space<vmem>>, %arg4: memref<1x128xf32, #tpu.memory_space<vmem>>, %arg5: memref<128x128xbf16, #tpu.memory_space<vmem>>) attributes {dimension_semantics = [#tpu.dimension_semantics<parallel>, #tpu.dimension_semantics<parallel>], iteration_bounds = array<i64: 1, 1>, scalar_prefetch = 0 : i64, scratch_operands = 0 : i64, tpu.core_type = #tpu.core_type<tc>, window_params = [{transform_indices = @transform_0, window_bounds = array<i64: 128, 128>}, {transform_indices = @transform_1, window_bounds = array<i64: 128, 128>}, {transform_indices = @transform_2, window_bounds = array<i64: 1, 128>}, {transform_indices = @transform_3, window_bounds = array<i64: 128, 128>}]} {
    %c0 = arith.constant 0 : index
    %c0_0 = arith.constant 0 : index
    %0 = vector.load %arg2[%c0, %c0_0] : memref<128x128xbf16, #tpu.memory_space<vmem>>, vector<128x128xbf16>
    %c0_1 = arith.constant 0 : index
    %c0_2 = arith.constant 0 : index
    %1 = vector.load %arg3[%c0_1, %c0_2] : memref<128x128xbf16, #tpu.memory_space<vmem>>, vector<128x128xbf16>
    %cst = arith.constant dense<0.000000e+00> : vector<128x128xf32>
    %2 = tpu.matmul %0, %1, %cst {dimension_numbers = #tpu.dot_dimension_numbers<[1], [0], [0], [1], [0, 0, 1, 1], [], []>} : vector<128x128xbf16>, vector<128x128xbf16>, vector<128x128xf32> -> vector<128x128xf32>
    %c0_3 = arith.constant 0 : index
    %c0_4 = arith.constant 0 : index
    %3 = vector.load %arg4[%c0_3, %c0_4] : memref<1x128xf32, #tpu.memory_space<vmem>>, vector<1x128xf32>
    %4 = vector.broadcast %3 : vector<1x128xf32> to vector<128x128xf32>
    %5 = arith.addf %2, %4 : vector<128x128xf32>
    %cst_5 = arith.constant 0.000000e+00 : f32
    %6 = vector.broadcast %cst_5 : f32 to vector<128x128xf32>
    %7 = arith.maximumf %5, %6 : vector<128x128xf32>
    %8 = arith.truncf %7 : vector<128x128xf32> to vector<128x128xbf16>
    %c0_6 = arith.constant 0 : index
    %c0_7 = arith.constant 0 : index
    %9 = vector.load %arg5[%c0_6, %c0_7] : memref<128x128xbf16, #tpu.memory_space<vmem>>, vector<128x128xbf16>
    tpu.vector_store %arg5[%c0_6, %c0_7], %8 {strides = array<i32>} : memref<128x128xbf16, #tpu.memory_space<vmem>>, vector<128x128xbf16>,
    return
  }
  func.func @transform_0(%arg0: i32, %arg1: i32) -> (i32, i32) {
    %c0_i32 = arith.constant 0 : i32
    %c0_i32_0 = arith.constant 0 : i32
    return %arg0, %c0_i32 : i32, i32
  }
  func.func @transform_1(%arg0: i32, %arg1: i32) -> (i32, i32) {
    %c0_i32 = arith.constant 0 : i32
    %c0_i32_0 = arith.constant 0 : i32
    return %c0_i32, %arg1 : i32, i32
  }
  func.func @transform_2(%arg0: i32, %arg1: i32) -> (i32, i32) {
    %c0_i32 = arith.constant 0 : i32
    %c0_i32_0 = arith.constant 0 : i32
    return %c0_i32, %arg1 : i32, i32
  }
  func.func @transform_3(%arg0: i32, %arg1: i32) -> (i32, i32) {
    %c0_i32 = arith.constant 0 : i32
    return %arg0, %arg1 : i32, i32
  }
}

</mosaic_0001>

<llo_original>
// kernel: tpu_custom_call.1
$region0: #{tpu_custom_call.1}
  #allocation0 [shape = 'u32[]', space=smem, size = 0x4, offset = 0x4, fixed_abs, tag = 'smem constant byte address 0x4 - core index']
  #allocation1 [shape = 'u32[144,128]{1,0:T(1,128)}', space=vmem, size = 0x12000, scoped, tag = 'internal scratch']
  %s0 = inlined_call_operand.hbm [shape: bf16[128,128], index: 0, kind: input, shape index: {}]
  %s1 = inlined_call_operand.hbm [shape: bf16[128,128], index: 1, kind: input, shape index: {}]
  %s2 = inlined_call_operand.vmem [shape: f32[1,128], index: 2, kind: input, shape index: {}]
  %s3 = inlined_call_operand.hbm [shape: bf16[128,128], index: 3, kind: output, shape index: {}]
  %s4 = sld [smem:[#allocation0]]
  $region30: #{tpu_custom_call.1} parent=0
    _
  %s6 = ssub.s32 1, %s4
  %s7 = scalar_select 0, %s6, %s4
  $region1: #{tpu_custom_call.1} parent=0
    #allocation2 [shape = 'u8[32768]{0}', space=vmem, size = 0x8000, scoped, tag = 'input window, operand 0, single buffered']
    #allocation3 [shape = 's32[1]{0}', space=sflag, size = 0x4, scoped, tag = 'scoped memory for tpu_custom_call.1']
    #allocation4 [shape = 's32[1]{0}', space=sflag, size = 0x4, scoped, tag = 'scoped memory for tpu_custom_call.1']
    #allocation5 [shape = 'u8[32768]{0}', space=vmem, size = 0x8000, scoped, tag = 'input window, operand 1, single buffered']
    #allocation6 [shape = 's32[1]{0}', space=sflag, size = 0x4, scoped, tag = 'scoped memory for tpu_custom_call.1']
    #allocation7 [shape = 'u8[32768]{0}', space=vmem, size = 0x8000, scoped, tag = 'output window, operand 0, single buffered']
    %8 = vsyncpa [#allocation3], 0
    %9 = vsyncpa [#allocation6], 0
    %10 = vsyncpa [#allocation4], 0
    // Predicated region
    $region2: #{tpu_custom_call.1} parent=1 // pred_check
      _
    $region3: #{tpu_custom_call.1} parent=1 // pred_check_branch
      %12 = sbr.rel (0) target = $region5
    $region4: #{tpu_custom_call.1} parent=1 // pred_region
      %s14 = ssub.s32 1024, 1024
      %15 = vsyncadd [#allocation3], %s14
      %s16 = sshll.u32 [#allocation2], 4
      %s17 = int_to_ptr.vmem [resolvable:$true] %s16
      %22 = dma.hbm_to_vmem [thread:$0]  %s0, 1024, %s17, [#allocation3], 64, 64, 4
    $region5: #{tpu_custom_call.1} parent=1 // pred_fallthru
      _
    // Predicated region
    $region6: #{tpu_custom_call.1} parent=1 // pred_check
      _
    $region7: #{tpu_custom_call.1} parent=1 // pred_check_branch
      %24 = sbr.rel (0) target = $region9
    $region8: #{tpu_custom_call.1} parent=1 // pred_region
      %s26 = ssub.s32 1024, 1024
      %27 = vsyncadd [#allocation6], %s26
      %s28 = sshll.u32 [#allocation5], 4
      %s29 = int_to_ptr.vmem [resolvable:$true] %s28
      %34 = dma.hbm_to_vmem [thread:$0]  %s1, 1024, %s29, [#allocation6], 64, 64, 4
    $region9: #{tpu_custom_call.1} parent=1 // pred_fallthru
      _
    // Predicated region
    $region10: #{tpu_custom_call.1} parent=1 // pred_check
      _
    $region11: #{tpu_custom_call.1} parent=1 // pred_check_branch
      %36 = sbr.rel (0) target = $region13
    $region12: #{tpu_custom_call.1} parent=1 // pred_region
      _
    $region13: #{tpu_custom_call.1} parent=1 // pred_fallthru
      _
    // Predicated region
    $region14: #{tpu_custom_call.1} parent=1 // pred_check
      _
    $region15: #{tpu_custom_call.1} parent=1 // pred_check_branch
      %38 = sbr.rel (0) target = $region17
    $region16: #{tpu_custom_call.1} parent=1 // pred_region
      %39 = dma.done [#allocation3], 1024
    $region17: #{tpu_custom_call.1} parent=1 // pred_fallthru
      _
    // Predicated region
    $region18: #{tpu_custom_call.1} parent=1 // pred_check
      _
    $region19: #{tpu_custom_call.1} parent=1 // pred_check_branch
      %41 = sbr.rel (0) target = $region21
    $region20: #{tpu_custom_call.1} parent=1 // pred_region
      %42 = dma.done [#allocation6], 1024
    $region21: #{tpu_custom_call.1} parent=1 // pred_fallthru
      _
    %v44 = vld [vmem:[#allocation2] sm:$0xf]
    %v45 = vld [vmem:[#allocation2 + $0x4] sm:$0xf]
    %v46 = vld [vmem:[#allocation2 + $0x8] sm:$0xf]
    %v47 = vld [vmem:[#allocation2 + $0xc] sm:$0xf]
    %v48 = vld [vmem:[#allocation2 + $0x10] sm:$0xf]
    %v49 = vld [vmem:[#allocation2 + $0x14] sm:$0xf]
    %v50 = vld [vmem:[#allocation2 + $0x18] sm:$0xf]
    %v51 = vld [vmem:[#allocation2 + $0x1c] sm:$0xf]
    %v52 = vld [vmem:[#allocation2 + $0x20] sm:$0xf]
    %v53 = vld [vmem:[#allocation2 + $0x24] sm:$0xf]
    %v54 = vld [vmem:[#allocation2 + $0x28] sm:$0xf]
    %v55 = vld [vmem:[#allocation2 + $0x2c] sm:$0xf]
    %v56 = vld [vmem:[#allocation2 + $0x30] sm:$0xf]
    %v57 = vld [vmem:[#allocation2 + $0x34] sm:$0xf]
    %v58 = vld [vmem:[#allocation2 + $0x38] sm:$0xf]
    %v59 = vld [vmem:[#allocation2 + $0x3c] sm:$0xf]
    %v60 = vld [vmem:[#allocation5] sm:$0xf]
    %v61 = vld [vmem:[#allocation5 + $0x4] sm:$0xf]
    %v62 = vld [vmem:[#allocation5 + $0x8] sm:$0xf]
    %v63 = vld [vmem:[#allocation5 + $0xc] sm:$0xf]
    %v64 = vld [vmem:[#allocation5 + $0x10] sm:$0xf]
    %v65 = vld [vmem:[#allocation5 + $0x14] sm:$0xf]
    %v66 = vld [vmem:[#allocation5 + $0x18] sm:$0xf]
    %v67 = vld [vmem:[#allocation5 + $0x1c] sm:$0xf]
    %v68 = vld [vmem:[#allocation5 + $0x20] sm:$0xf]
    %v69 = vld [vmem:[#allocation5 + $0x24] sm:$0xf]
    %v70 = vld [vmem:[#allocation5 + $0x28] sm:$0xf]
    %v71 = vld [vmem:[#allocation5 + $0x2c] sm:$0xf]
    %v72 = vld [vmem:[#allocation5 + $0x30] sm:$0xf]
    %v73 = vld [vmem:[#allocation5 + $0x34] sm:$0xf]
    %v74 = vld [vmem:[#allocation5 + $0x38] sm:$0xf]
    %v75 = vld [vmem:[#allocation5 + $0x3c] sm:$0xf]
    %v76 = vld [vmem:[%s2] sm:$0x1]
    %v78 = vlaneseq
    %v79 = vshrl.u32 %v78, 7
    %v80 = vsub.s32 0, %v79
    %v81 = vrot.slane %v76, %v80
    %v99 = vunpack.c.l.b16 %v44
    %v100 = vunpack.c.l.b16 %v45
    %v101 = vunpack.c.l.b16 %v46
    %v102 = vunpack.c.l.b16 %v47
    %v103 = vunpack.c.l.b16 %v48
    %v104 = vunpack.c.l.b16 %v49
    %v105 = vunpack.c.l.b16 %v50
    %v106 = vunpack.c.l.b16 %v51
    %v107 = vunpack.c.l.b16 %v52
    %v108 = vunpack.c.l.b16 %v53
    %v109 = vunpack.c.l.b16 %v54
    %v110 = vunpack.c.l.b16 %v55
    %v111 = vunpack.c.l.b16 %v56
    %v112 = vunpack.c.l.b16 %v57
    %v113 = vunpack.c.l.b16 %v58
    %v114 = vunpack.c.l.b16 %v59
    %v115 = vpack.c.b16 %v100, %v99
    %v116 = vpack.c.b16 %v102, %v101
    %v117 = vpack.c.b16 %v104, %v103
    %v118 = vpack.c.b16 %v106, %v105
    %v119 = vpack.c.b16 %v108, %v107
    %v120 = vpack.c.b16 %v110, %v109
    %v121 = vpack.c.b16 %v112, %v111
    %v122 = vpack.c.b16 %v114, %v113
    %v147 = vunpack.c.l.b16 %v60
    %v148 = vunpack.c.l.b16 %v61
    %v149 = vunpack.c.l.b16 %v62
    %v150 = vunpack.c.l.b16 %v63
    %v151 = vunpack.c.l.b16 %v64
    %v152 = vunpack.c.l.b16 %v65
    %v153 = vunpack.c.l.b16 %v66
    %v154 = vunpack.c.l.b16 %v67
    %v155 = vunpack.c.l.b16 %v68
    %v156 = vunpack.c.l.b16 %v69
    %v157 = vunpack.c.l.b16 %v70
    %v158 = vunpack.c.l.b16 %v71
    %v159 = vunpack.c.l.b16 %v72
    %v160 = vunpack.c.l.b16 %v73
    %v161 = vunpack.c.l.b16 %v74
    %v162 = vunpack.c.l.b16 %v75
    %v163 = vpack.c.b16 %v148, %v147
    %v164 = vpack.c.b16 %v150, %v149
    %v165 = vpack.c.b16 %v152, %v151
    %v166 = vpack.c.b16 %v154, %v153
    %v167 = vpack.c.b16 %v156, %v155
    %v168 = vpack.c.b16 %v158, %v157
    %v169 = vpack.c.b16 %v160, %v159
    %v170 = vpack.c.b16 %v162, %v161
    %179 = vmatprep.subr.bf16.mxu0 0
    %180 = vmatpush1.bf16.msra.mxu0 %v163
    %181 = vmatprep.subr.bf16.mxu0 0
    %182 = vmatpush1.bf16.msra.mxu0 %v164
    %183 = vmatprep.subr.bf16.mxu0 0
    %184 = vmatpush1.bf16.msra.mxu0 %v165
    %185 = vmatprep.subr.bf16.mxu0 0
    %186 = vmatpush1.bf16.msra.mxu0 %v166
    %187 = vmatprep.subr.bf16.mxu0 0
    %188 = vmatpush1.bf16.msra.mxu0 %v167
    %189 = vmatprep.subr.bf16.mxu0 0
    %190 = vmatpush1.bf16.msra.mxu0 %v168
    %191 = vmatprep.subr.bf16.mxu0 0
    %192 = vmatpush1.bf16.msra.mxu0 %v169
    %193 = vmatprep.subr.bf16.mxu0 0
    %194 = vmatpush1.bf16.msra.mxu0 %v170
    %195 = vmatprep.subr.bf16.mxu0 0
    %196 = vmatpush1.bf16.msra.mxu0 0
    %197 = vmatprep.subr.bf16.mxu0 0
    %198 = vmatpush1.bf16.msra.mxu0 0
    %199 = vmatprep.subr.bf16.mxu0 0
    %200 = vmatpush1.bf16.msra.mxu0 0
    %201 = vmatprep.subr.bf16.mxu0 0
    %202 = vmatpush1.bf16.msra.mxu0 0
    %203 = vmatprep.subr.bf16.mxu0 0
    %204 = vmatpush1.bf16.msra.mxu0 0
    %205 = vmatprep.subr.bf16.mxu0 0
    %206 = vmatpush1.bf16.msra.mxu0 0
    %207 = vmatprep.subr.bf16.mxu0 0
    %208 = vmatpush1.bf16.msra.mxu0 0
    %209 = vmatprep.subr.bf16.mxu0 0
    %210 = vmatpush1.bf16.msra.mxu0 0
    %211 = vmatprep.mubr.bf16.mxu0 0
    %212 = vmatmul.mubr.bf16.gmra.mrb[0].mxu0 %v115
    %v213 = vpop.f32.mrb[0].mxu0
    %v214 = vadd.f32 %v81, %v213
    %v215 = vpop.f32.mrb[0].mxu0
    %v216 = vpop.f32.mrb[0].mxu0
    %v217 = vadd.f32 %v81, %v216
    %v218 = vpop.f32.mrb[0].mxu0
    %219 = vmatprep.mubr.bf16.mxu0 0
    %220 = vmatmul.mubr.bf16.gmra.mrb[0].mxu0 %v116
    %v221 = vpop.f32.mrb[0].mxu0
    %v222 = vadd.f32 %v81, %v221
    %v223 = vpop.f32.mrb[0].mxu0
    %v224 = vpop.f32.mrb[0].mxu0
    %v225 = vadd.f32 %v81, %v224
    %v226 = vpop.f32.mrb[0].mxu0
    %227 = vmatprep.mubr.bf16.mxu0 0
    %228 = vmatmul.mubr.bf16.gmra.mrb[0].mxu0 %v117
    %v229 = vpop.f32.mrb[0].mxu0
    %v230 = vadd.f32 %v81, %v229
    %v231 = vpop.f32.mrb[0].mxu0
    %v232 = vpop.f32.mrb[0].mxu0
    %v233 = vadd.f32 %v81, %v232
    %v234 = vpop.f32.mrb[0].mxu0
    %235 = vmatprep.mubr.bf16.mxu0 0
    %236 = vmatmul.mubr.bf16.gmra.mrb[0].mxu0 %v118
    %v237 = vpop.f32.mrb[0].mxu0
    %v238 = vadd.f32 %v81, %v237
    %v239 = vpop.f32.mrb[0].mxu0
    %v240 = vpop.f32.mrb[0].mxu0
    %v241 = vadd.f32 %v81, %v240
    %v242 = vpop.f32.mrb[0].mxu0
    %243 = vmatprep.mubr.bf16.mxu0 0
    %244 = vmatmul.mubr.bf16.gmra.mrb[0].mxu0 %v119
    %v245 = vpop.f32.mrb[0].mxu0
    %v246 = vadd.f32 %v81, %v245
    %v247 = vpop.f32.mrb[0].mxu0
    %v248 = vpop.f32.mrb[0].mxu0
    %v249 = vadd.f32 %v81, %v248
    %v250 = vpop.f32.mrb[0].mxu0
    %251 = vmatprep.mubr.bf16.mxu0 0
    %252 = vmatmul.mubr.bf16.gmra.mrb[0].mxu0 %v120
    %v253 = vpop.f32.mrb[0].mxu0
    %v254 = vadd.f32 %v81, %v253
    %v255 = vpop.f32.mrb[0].mxu0
    %v256 = vpop.f32.mrb[0].mxu0
    %v257 = vadd.f32 %v81, %v256
    %v258 = vpop.f32.mrb[0].mxu0
    %259 = vmatprep.mubr.bf16.mxu0 0
    %260 = vmatmul.mubr.bf16.gmra.mrb[0].mxu0 %v121
    %v261 = vpop.f32.mrb[0].mxu0
    %v262 = vadd.f32 %v81, %v261
    %v263 = vpop.f32.mrb[0].mxu0
    %v264 = vpop.f32.mrb[0].mxu0
    %v265 = vadd.f32 %v81, %v264
    %v266 = vpop.f32.mrb[0].mxu0
    %267 = vmatprep.mubr.bf16.mxu0 0
    %268 = vmatmul.mubr.bf16.gmra.mrb[0].mxu0 %v122
    %v269 = vpop.f32.mrb[0].mxu0
    %v270 = vadd.f32 %v81, %v269
    %v271 = vpop.f32.mrb[0].mxu0
    %v272 = vpop.f32.mrb[0].mxu0
    %v273 = vadd.f32 %v81, %v272
    %v274 = vpop.f32.mrb[0].mxu0
    %275 = vdwg.mxu0
    %v276 = vmax.f32 %v214, 0.0
    %v277 = vmax.f32 %v217, 0.0
    %v278 = vmax.f32 %v222, 0.0
    %v279 = vmax.f32 %v225, 0.0
    %v280 = vmax.f32 %v230, 0.0
    %v281 = vmax.f32 %v233, 0.0
    %v282 = vmax.f32 %v238, 0.0
    %v283 = vmax.f32 %v241, 0.0
    %v284 = vmax.f32 %v246, 0.0
    %v285 = vmax.f32 %v249, 0.0
    %v286 = vmax.f32 %v254, 0.0
    %v287 = vmax.f32 %v257, 0.0
    %v288 = vmax.f32 %v262, 0.0
    %v289 = vmax.f32 %v265, 0.0
    %v290 = vmax.f32 %v270, 0.0
    %v291 = vmax.f32 %v273, 0.0
    %v292 = vpack.c.bf16 %v277, %v276
    %v293 = vpack.c.bf16 %v279, %v278
    %v294 = vpack.c.bf16 %v281, %v280
    %v295 = vpack.c.bf16 %v283, %v282
    %v296 = vpack.c.bf16 %v285, %v284
    %v297 = vpack.c.bf16 %v287, %v286
    %v298 = vpack.c.bf16 %v289, %v288
    %v299 = vpack.c.bf16 %v291, %v290
    %v308 = vunpack.c.l.b16 %v292
    %v309 = vunpack.c.h.b16 %v292
    %v310 = vunpack.c.l.b16 %v293
    %v311 = vunpack.c.h.b16 %v293
    %v312 = vunpack.c.l.b16 %v294
    %v313 = vunpack.c.h.b16 %v294
    %v314 = vunpack.c.l.b16 %v295
    %v315 = vunpack.c.h.b16 %v295
    %v316 = vunpack.c.l.b16 %v296
    %v317 = vunpack.c.h.b16 %v296
    %v318 = vunpack.c.l.b16 %v297
    %v319 = vunpack.c.h.b16 %v297
    %v320 = vunpack.c.l.b16 %v298
    %v321 = vunpack.c.h.b16 %v298
    %v322 = vunpack.c.l.b16 %v299
    %v323 = vunpack.c.h.b16 %v299
    %v324 = vpack.c.b16 %v308, %v308
    %v325 = vpack.c.b16 %v309, %v309
    %v326 = vpack.c.b16 %v310, %v310
    %v327 = vpack.c.b16 %v311, %v311
    %v328 = vpack.c.b16 %v312, %v312
    %v329 = vpack.c.b16 %v313, %v313
    %v330 = vpack.c.b16 %v314, %v314
    %v331 = vpack.c.b16 %v315, %v315
    %v332 = vpack.c.b16 %v316, %v316
    %v333 = vpack.c.b16 %v317, %v317
    %v334 = vpack.c.b16 %v318, %v318
    %v335 = vpack.c.b16 %v319, %v319
    %v336 = vpack.c.b16 %v320, %v320
    %v337 = vpack.c.b16 %v321, %v321
    %v338 = vpack.c.b16 %v322, %v322
    %v339 = vpack.c.b16 %v323, %v323
    %356 = vst [vmem:[#allocation7] sm:$0xf] %v324
    %357 = vst [vmem:[#allocation7 + $0x4] sm:$0xf] %v325
    %358 = vst [vmem:[#allocation7 + $0x8] sm:$0xf] %v326
    %359 = vst [vmem:[#allocation7 + $0xc] sm:$0xf] %v327
    %360 = vst [vmem:[#allocation7 + $0x10] sm:$0xf] %v328
    %361 = vst [vmem:[#allocation7 + $0x14] sm:$0xf] %v329
    %362 = vst [vmem:[#allocation7 + $0x18] sm:$0xf] %v330
    %363 = vst [vmem:[#allocation7 + $0x1c] sm:$0xf] %v331
    %364 = vst [vmem:[#allocation7 + $0x20] sm:$0xf] %v332
    %365 = vst [vmem:[#allocation7 + $0x24] sm:$0xf] %v333
    %366 = vst [vmem:[#allocation7 + $0x28] sm:$0xf] %v334
    %367 = vst [vmem:[#allocation7 + $0x2c] sm:$0xf] %v335
    %368 = vst [vmem:[#allocation7 + $0x30] sm:$0xf] %v336
    %369 = vst [vmem:[#allocation7 + $0x34] sm:$0xf] %v337
    %370 = vst [vmem:[#allocation7 + $0x38] sm:$0xf] %v338
    %371 = vst [vmem:[#allocation7 + $0x3c] sm:$0xf] %v339
    // Predicated region
    $region22: #{tpu_custom_call.1} parent=1 // pred_check
      _
    $region23: #{tpu_custom_call.1} parent=1 // pred_check_branch
      %373 = sbr.rel (0) target = $region25
    $region24: #{tpu_custom_call.1} parent=1 // pred_region
      %s375 = ssub.s32 1024, 1024
      %376 = vsyncadd [#allocation4], %s375
      %s377 = sshll.u32 [#allocation7], 4
      %s378 = int_to_ptr.vmem [resolvable:$true] %s377
      %383 = dma.vmem_to_hbm [thread:$0]  %s378, 1024, %s3, [#allocation4], 64, 64, 4
    $region25: #{tpu_custom_call.1} parent=1 // pred_fallthru
      _
    // Predicated region
    $region26: #{tpu_custom_call.1} parent=1 // pred_check
      _
    $region27: #{tpu_custom_call.1} parent=1 // pred_check_branch
      %385 = sbr.rel (0) target = $region29
    $region28: #{tpu_custom_call.1} parent=1 // pred_region
      %386 = dma.done [#allocation4], 1024
    $region29: #{tpu_custom_call.1} parent=1 // pred_fallthru
      _
    %387 = vsyncpa [#allocation3], 1
    %388 = vsyncpa [#allocation6], 1
    %389 = vsyncpa [#allocation4], 1

</llo_original>
